<compile_context>
chip_gen: v6e
topology: v6e:2x2x1
jax: 0.10.0
libtpu: 0.0.40
codegen_flags: <defaults>
</compile_context>

<pallas_src>
import functools
import math

import jax
import jax.numpy as jnp
from jax.experimental import pallas as pl
from jax.experimental.pallas import tpu as pltpu


LANE = 128  # TPU lane width; the action dim is padded up to this for lane-dense stores


def _round_up(x, m):
    return ((x + m - 1) // m) * m


def _choose_tile(B, batch_tile):
    """Batch tile: multiple of 16 (bf16 sublane packing); >= 2 grid steps for large B
    so the 'parallel' grid axis can shard across v7x's two TensorCores."""
    full = _round_up(max(B, 1), 16)
    cap = full if full < 512 else _round_up((full + 1) // 2, 16)
    tb = min(_round_up(max(batch_tile, 16), 16), cap)
    return max(tb, 16)


def dqn_mlp_kernel(x_ref, w1_ref, b1_ref, w2_ref, b2_ref,
                   w3_ref, b3_ref, w4_ref, b4_ref,
                   *out_refs, n_actions, emit_q, emit_act):
    # Layer 1 in f32 (tiny [TB, n_obs] x [n_obs, 128] matmul, better accuracy).
    h = jnp.dot(x_ref[...], w1_ref[...], preferred_element_type=jnp.float32) + b1_ref[...]
    h = jnp.maximum(h, 0.0).astype(jnp.bfloat16)

    # Layers 2-4: bf16 MXU operands, f32 accumulation, f32 bias/ReLU.
    h = jnp.dot(h, w2_ref[...], preferred_element_type=jnp.float32) + b2_ref[...]
    h = jnp.maximum(h, 0.0).astype(jnp.bfloat16)

    h = jnp.dot(h, w3_ref[...], preferred_element_type=jnp.float32) + b3_ref[...]
    h = jnp.maximum(h, 0.0).astype(jnp.bfloat16)

    q = jnp.dot(h, w4_ref[...], preferred_element_type=jnp.float32) + b4_ref[...]

    idx = 0
    if emit_q:
        # Lane-dense [TB, 128] bf16 store: unmasked vst, half the HBM writeback of f32.
        out_refs[idx][...] = q.astype(jnp.bfloat16)
        idx += 1
    if emit_act:
        # Greedy-action argmax over the valid columns. Round q to bf16 first so the
        # result is bit-identical to argmax of the stored bf16 q output.
        q_r = q.astype(jnp.bfloat16).astype(jnp.float32)
        col = jax.lax.broadcasted_iota(jnp.int32, q_r.shape, 1)
        masked = jnp.where(col < n_actions, q_r, -jnp.inf)
        q_max = jnp.max(masked, axis=-1, keepdims=True)
        act = jnp.min(jnp.where(masked == q_max, col, q_r.shape[-1]),
                      axis=-1, keepdims=True)
        out_refs[idx][...] = act.astype(jnp.int32)


def prepare_dqn_params(params):
    """One-time weight preparation (hoisted out of the per-call hot path).

    Returns a tuple (w1, b1, w2, b2, w3, b3, w4, b4):
      * layer-1 operands stay f32,
      * layer 2-4 weights are bf16 (MXU-native),
      * the final layer is zero-padded out to 128 lanes,
      * biases stay f32 (added post-accumulation)."""
    n_actions = params["w4"].shape[1]
    pad = LANE - n_actions
    return (
        params["w1"].astype(jnp.float32),
        params["b1"].astype(jnp.float32),
        params["w2"].astype(jnp.bfloat16),
        params["b2"].astype(jnp.float32),
        params["w3"].astype(jnp.bfloat16),
        params["b3"].astype(jnp.float32),
        jnp.pad(params["w4"], ((0, 0), (0, pad))).astype(jnp.bfloat16),
        jnp.pad(params["b4"], ((0, 0), (0, pad))).astype(jnp.float32),
    )


def dqn_forward(x, weights, n_actions, *, batch_tile=1024,
                return_q=True, return_actions=False):
    """x: [B, n_obs] f32. weights: output of prepare_dqn_params.

    Returns q [B, n_actions] and/or greedy actions [B] depending on the flags."""
    assert return_q or return_actions
    B, n_obs = x.shape

    TB = _choose_tile(B, batch_tile)
    B_pad = _round_up(B, TB)
    x_p = x if B_pad == B else jnp.pad(x, ((0, B_pad - B), (0, 0)))

    args = (x_p,) + tuple(weights)

    stream = lambda i: (i, 0)     # streamed / double-buffered per batch tile
    resident = lambda i: (0, 0)   # same block every grid step -> stays VMEM-resident

    in_specs = [pl.BlockSpec((TB, n_obs), stream)]
    in_specs += [pl.BlockSpec(w.shape, resident) for w in weights]

    out_specs, out_shapes = [], []
    if return_q:
        out_specs.append(pl.BlockSpec((TB, LANE), stream))
        out_shapes.append(jax.ShapeDtypeStruct((B_pad, LANE), jnp.bfloat16))
    if return_actions:
        out_specs.append(pl.BlockSpec((TB, 1), stream))
        out_shapes.append(jax.ShapeDtypeStruct((B_pad, 1), jnp.int32))

    outs = pl.pallas_call(
        functools.partial(dqn_mlp_kernel, n_actions=n_actions,
                          emit_q=return_q, emit_act=return_actions),
        out_shape=tuple(out_shapes),
        grid=(B_pad // TB,),
        in_specs=in_specs,
        out_specs=tuple(out_specs),
        compiler_params=pltpu.CompilerParams(
            dimension_semantics=("parallel",)),
    )(*args)

    results = []
    idx = 0
    if return_q:
        results.append(outs[idx][:B, :n_actions].astype(jnp.float32))
        idx += 1
    if return_actions:
        results.append(outs[idx][:B, 0])
        idx += 1
    return results[0] if len(results) == 1 else tuple(results)


def init_dqn_params(key, n_observations, n_actions):
    """Deterministic init mimicking PyTorch nn.Linear default (U[-1/sqrt(fan_in), ...]).

    Weights are stored as [in_features, out_features] (transposed vs torch)."""
    dims = [(n_observations, 128), (128, 256), (256, 128), (128, n_actions)]
    params = {}
    for idx, (fan_in, fan_out) in enumerate(dims, start=1):
        key, wk, bk = jax.random.split(key, 3)
        bound = 1.0 / math.sqrt(fan_in)
        params[f"w{idx}"] = jax.random.uniform(
            wk, (fan_in, fan_out), jnp.float32, -bound, bound)
        params[f"b{idx}"] = jax.random.uniform(
            bk, (1, fan_out), jnp.float32, -bound, bound)
    return params


def dqn_reference(x, params):
    """Pure-JAX f32 reference for correctness check."""
    h = jnp.maximum(x @ params["w1"] + params["b1"], 0.0)
    h = jnp.maximum(h @ params["w2"] + params["b2"], 0.0)
    h = jnp.maximum(h @ params["w3"] + params["b3"], 0.0)
    return h @ params["w4"] + params["b4"]


if __name__ == "__main__":
    # LunarLander-v3: 8 observations, 4 actions.
    n_observations, n_actions = 8, 4
    batch = 2

    key = jax.random.PRNGKey(0)
    key, xk = jax.random.split(key)
    x = jax.random.normal(xk, (batch, n_observations), jnp.float32)

    params = init_dqn_params(key, n_observations, n_actions)
    weights = prepare_dqn_params(params)   # one-time bf16 cast + lane padding
    weights = jax.block_until_ready(weights)

    # Action-selection path: Q-values + fused greedy argmax in one kernel call.
    q, actions = dqn_forward(x, weights, n_actions,
                             return_q=True, return_actions=True)
    q = jax.block_until_ready(q)
    actions = jax.block_until_ready(actions)

    ref = dqn_reference(x, params)
    assert q.shape == (batch, n_actions)
    assert actions.shape == (batch,)
    # bf16 matmul operands / bf16 q store (f32 accumulation) => relaxed tolerance.
    assert jnp.allclose(q, ref, atol=5e-2, rtol=5e-2), "Q-value mismatch vs JAX reference"
    assert jnp.array_equal(actions, jnp.argmax(q, axis=-1)), "fused argmax mismatch"

    # Actions-only variant (per-step latency path: no q writeback at all).
    act_only = jax.block_until_ready(
        dqn_forward(x, weights, n_actions, return_q=False, return_actions=True))
    assert jnp.array_equal(act_only, actions), "actions-only variant mismatch"

    # Exercise the multi-tile grid + batch-padding, q-only (training) path.
    key, xk2 = jax.random.split(key)
    x_big = jax.random.normal(xk2, (130, n_observations), jnp.float32)
    q_big = jax.block_until_ready(
        dqn_forward(x_big, weights, n_actions, batch_tile=64))
    ref_big = dqn_reference(x_big, params)
    assert q_big.shape == (130, n_actions)
    assert jnp.allclose(q_big, ref_big, atol=5e-2, rtol=5e-2), "gridded batch mismatch"

    print("KERNEL_OK")
</pallas_src>

<mosaic_0001>
module attributes {stable_mosaic.version = 11 : i64} {
  func.func @dqn_mlp_kernel(%arg0: i32, %arg1: memref<16x8xf32, #tpu.memory_space<vmem>>, %arg2: memref<8x128xf32, #tpu.memory_space<vmem>>, %arg3: memref<1x128xf32, #tpu.memory_space<vmem>>, %arg4: memref<128x256xbf16, #tpu.memory_space<vmem>>, %arg5: memref<1x256xf32, #tpu.memory_space<vmem>>, %arg6: memref<256x128xbf16, #tpu.memory_space<vmem>>, %arg7: memref<1x128xf32, #tpu.memory_space<vmem>>, %arg8: memref<128x128xbf16, #tpu.memory_space<vmem>>, %arg9: memref<1x128xf32, #tpu.memory_space<vmem>>, %arg10: memref<16x128xbf16, #tpu.memory_space<vmem>>, %arg11: memref<16x1xi32, #tpu.memory_space<vmem>>) attributes {dimension_semantics = [#tpu.dimension_semantics<parallel>], iteration_bounds = array<i64: 1>, scalar_prefetch = 0 : i64, scratch_operands = 0 : i64, tpu.core_type = #tpu.core_type<tc>, window_params = [{transform_indices = @transform_0, window_bounds = array<i64: 16, 8>}, {pipeline_mode = #tpu.pipeline_mode<synchronous>, transform_indices = @transform_1, window_bounds = array<i64: 8, 128>}, {pipeline_mode = #tpu.pipeline_mode<synchronous>, transform_indices = @transform_2, window_bounds = array<i64: 1, 128>}, {pipeline_mode = #tpu.pipeline_mode<synchronous>, transform_indices = @transform_3, window_bounds = array<i64: 128, 256>}, {pipeline_mode = #tpu.pipeline_mode<synchronous>, transform_indices = @transform_4, window_bounds = array<i64: 1, 256>}, {pipeline_mode = #tpu.pipeline_mode<synchronous>, transform_indices = @transform_5, window_bounds = array<i64: 256, 128>}, {pipeline_mode = #tpu.pipeline_mode<synchronous>, transform_indices = @transform_6, window_bounds = array<i64: 1, 128>}, {pipeline_mode = #tpu.pipeline_mode<synchronous>, transform_indices = @transform_7, window_bounds = array<i64: 128, 128>}, {pipeline_mode = #tpu.pipeline_mode<synchronous>, transform_indices = @transform_8, window_bounds = array<i64: 1, 128>}, {transform_indices = @transform_9, window_bounds = array<i64: 16, 128>}, {transform_indices = @transform_10, window_bounds = array<i64: 16, 1>}]} {
    %c0 = arith.constant 0 : index
    %c0_0 = arith.constant 0 : index
    %0 = vector.load %arg1[%c0, %c0_0] : memref<16x8xf32, #tpu.memory_space<vmem>>, vector<16x8xf32>
    %c0_1 = arith.constant 0 : index
    %c0_2 = arith.constant 0 : index
    %1 = vector.load %arg2[%c0_1, %c0_2] : memref<8x128xf32, #tpu.memory_space<vmem>>, vector<8x128xf32>
    %cst = arith.constant dense<0.000000e+00> : vector<16x128xf32>
    %2 = tpu.matmul %0, %1, %cst {dimension_numbers = #tpu.dot_dimension_numbers<[1], [0], [0], [1], [0, 0, 1, 1], [], []>} : vector<16x8xf32>, vector<8x128xf32>, vector<16x128xf32> -> vector<16x128xf32>
    %c0_3 = arith.constant 0 : index
    %c0_4 = arith.constant 0 : index
    %3 = vector.load %arg3[%c0_3, %c0_4] : memref<1x128xf32, #tpu.memory_space<vmem>>, vector<1x128xf32>
    %4 = vector.broadcast %3 : vector<1x128xf32> to vector<16x128xf32>
    %5 = arith.addf %2, %4 : vector<16x128xf32>
    %cst_5 = arith.constant 0.000000e+00 : f32
    %6 = vector.broadcast %cst_5 : f32 to vector<16x128xf32>
    %7 = arith.maximumf %5, %6 : vector<16x128xf32>
    %8 = arith.truncf %7 : vector<16x128xf32> to vector<16x128xbf16>
    %c0_6 = arith.constant 0 : index
    %c0_7 = arith.constant 0 : index
    %9 = vector.load %arg4[%c0_6, %c0_7] : memref<128x256xbf16, #tpu.memory_space<vmem>>, vector<128x256xbf16>
    %cst_8 = arith.constant dense<0.000000e+00> : vector<16x256xf32>
    %10 = tpu.matmul %8, %9, %cst_8 {dimension_numbers = #tpu.dot_dimension_numbers<[1], [0], [0], [1], [0, 0, 1, 1], [], []>} : vector<16x128xbf16>, vector<128x256xbf16>, vector<16x256xf32> -> vector<16x256xf32>
    %c0_9 = arith.constant 0 : index
    %c0_10 = arith.constant 0 : index
    %11 = vector.load %arg5[%c0_9, %c0_10] : memref<1x256xf32, #tpu.memory_space<vmem>>, vector<1x256xf32>
    %12 = vector.broadcast %11 : vector<1x256xf32> to vector<16x256xf32>
    %13 = arith.addf %10, %12 : vector<16x256xf32>
    %cst_11 = arith.constant 0.000000e+00 : f32
    %14 = vector.broadcast %cst_11 : f32 to vector<16x256xf32>
    %15 = arith.maximumf %13, %14 : vector<16x256xf32>
    %16 = arith.truncf %15 : vector<16x256xf32> to vector<16x256xbf16>
    %c0_12 = arith.constant 0 : index
    %c0_13 = arith.constant 0 : index
    %17 = vector.load %arg6[%c0_12, %c0_13] : memref<256x128xbf16, #tpu.memory_space<vmem>>, vector<256x128xbf16>
    %cst_14 = arith.constant dense<0.000000e+00> : vector<16x128xf32>
    %18 = tpu.matmul %16, %17, %cst_14 {dimension_numbers = #tpu.dot_dimension_numbers<[1], [0], [0], [1], [0, 0, 1, 1], [], []>} : vector<16x256xbf16>, vector<256x128xbf16>, vector<16x128xf32> -> vector<16x128xf32>
    %c0_15 = arith.constant 0 : index
    %c0_16 = arith.constant 0 : index
    %19 = vector.load %arg7[%c0_15, %c0_16] : memref<1x128xf32, #tpu.memory_space<vmem>>, vector<1x128xf32>
    %20 = vector.broadcast %19 : vector<1x128xf32> to vector<16x128xf32>
    %21 = arith.addf %18, %20 : vector<16x128xf32>
    %cst_17 = arith.constant 0.000000e+00 : f32
    %22 = vector.broadcast %cst_17 : f32 to vector<16x128xf32>
    %23 = arith.maximumf %21, %22 : vector<16x128xf32>
    %24 = arith.truncf %23 : vector<16x128xf32> to vector<16x128xbf16>
    %c0_18 = arith.constant 0 : index
    %c0_19 = arith.constant 0 : index
    %25 = vector.load %arg8[%c0_18, %c0_19] : memref<128x128xbf16, #tpu.memory_space<vmem>>, vector<128x128xbf16>
    %cst_20 = arith.constant dense<0.000000e+00> : vector<16x128xf32>
    %26 = tpu.matmul %24, %25, %cst_20 {dimension_numbers = #tpu.dot_dimension_numbers<[1], [0], [0], [1], [0, 0, 1, 1], [], []>} : vector<16x128xbf16>, vector<128x128xbf16>, vector<16x128xf32> -> vector<16x128xf32>
    %c0_21 = arith.constant 0 : index
    %c0_22 = arith.constant 0 : index
    %27 = vector.load %arg9[%c0_21, %c0_22] : memref<1x128xf32, #tpu.memory_space<vmem>>, vector<1x128xf32>
    %28 = vector.broadcast %27 : vector<1x128xf32> to vector<16x128xf32>
    %29 = arith.addf %26, %28 : vector<16x128xf32>
    %30 = arith.truncf %29 : vector<16x128xf32> to vector<16x128xbf16>
    %c0_23 = arith.constant 0 : index
    %c0_24 = arith.constant 0 : index
    %31 = vector.load %arg10[%c0_23, %c0_24] : memref<16x128xbf16, #tpu.memory_space<vmem>>, vector<16x128xbf16>
    tpu.vector_store %arg10[%c0_23, %c0_24], %30 {strides = array<i32>} : memref<16x128xbf16, #tpu.memory_space<vmem>>, vector<16x128xbf16>,
    %32 = arith.truncf %29 : vector<16x128xf32> to vector<16x128xbf16>
    %33 = arith.extf %32 : vector<16x128xbf16> to vector<16x128xf32>
    %34 = tpu.iota {dimensions = array<i32: 1>} : vector<16x128xi32>
    %c4_i32 = arith.constant 4 : i32
    %35 = vector.broadcast %c4_i32 : i32 to vector<16x128xi32>
    %36 = arith.cmpi slt, %34, %35 : vector<16x128xi32>
    %cst_25 = arith.constant 0xFF800000 : f32
    %37 = vector.broadcast %cst_25 : f32 to vector<16x128xf32>
    %38 = arith.select %36, %33, %37 : vector<16x128xi1>, vector<16x128xf32>
    %cst_26 = arith.constant dense<0xFF800000> : vector<16xf32>
    %39 = vector.multi_reduction <maximumf>, %38, %cst_26 [1] : vector<16x128xf32> to vector<16xf32>
    %40 = vector.shape_cast %39 : vector<16xf32> to vector<16x1xf32>
    %41 = vector.broadcast %40 : vector<16x1xf32> to vector<16x128xf32>
    %42 = arith.cmpf oeq, %38, %41 : vector<16x128xf32>
    %c128_i32 = arith.constant 128 : i32
    %43 = vector.broadcast %c128_i32 : i32 to vector<16x128xi32>
    %44 = arith.select %42, %34, %43 : vector<16x128xi1>, vector<16x128xi32>
    %cst_27 = arith.constant dense<2147483647> : vector<16xi32>
    %45 = vector.multi_reduction <minsi>, %44, %cst_27 [1] : vector<16x128xi32> to vector<16xi32>
    %46 = vector.shape_cast %45 : vector<16xi32> to vector<16x1xi32>
    %c0_28 = arith.constant 0 : index
    %c0_29 = arith.constant 0 : index
    %47 = vector.load %arg11[%c0_28, %c0_29] : memref<16x1xi32, #tpu.memory_space<vmem>>, vector<16x1xi32>
    tpu.vector_store %arg11[%c0_28, %c0_29], %46 {strides = array<i32>} : memref<16x1xi32, #tpu.memory_space<vmem>>, vector<16x1xi32>,
    return
  }
  func.func @transform_0(%arg0: i32) -> (i32, i32) {
    %c0_i32 = arith.constant 0 : i32
    %c0_i32_0 = arith.constant 0 : i32
    return %arg0, %c0_i32 : i32, i32
  }
  func.func @transform_1(%arg0: i32) -> (i32, i32) {
    %c0_i32 = arith.constant 0 : i32
    %c0_i32_0 = arith.constant 0 : i32
    %c0_i32_1 = arith.constant 0 : i32
    return %c0_i32, %c0_i32_0 : i32, i32
  }
  func.func @transform_2(%arg0: i32) -> (i32, i32) {
    %c0_i32 = arith.constant 0 : i32
    %c0_i32_0 = arith.constant 0 : i32
    %c0_i32_1 = arith.constant 0 : i32
    return %c0_i32, %c0_i32_0 : i32, i32
  }
  func.func @transform_3(%arg0: i32) -> (i32, i32) {
    %c0_i32 = arith.constant 0 : i32
    %c0_i32_0 = arith.constant 0 : i32
    %c0_i32_1 = arith.constant 0 : i32
    return %c0_i32, %c0_i32_0 : i32, i32
  }
  func.func @transform_4(%arg0: i32) -> (i32, i32) {
    %c0_i32 = arith.constant 0 : i32
    %c0_i32_0 = arith.constant 0 : i32
    %c0_i32_1 = arith.constant 0 : i32
    return %c0_i32, %c0_i32_0 : i32, i32
  }
  func.func @transform_5(%arg0: i32) -> (i32, i32) {
    %c0_i32 = arith.constant 0 : i32
    %c0_i32_0 = arith.constant 0 : i32
    %c0_i32_1 = arith.constant 0 : i32
    return %c0_i32, %c0_i32_0 : i32, i32
  }
  func.func @transform_6(%arg0: i32) -> (i32, i32) {
    %c0_i32 = arith.constant 0 : i32
    %c0_i32_0 = arith.constant 0 : i32
    %c0_i32_1 = arith.constant 0 : i32
    return %c0_i32, %c0_i32_0 : i32, i32
  }
  func.func @transform_7(%arg0: i32) -> (i32, i32) {
    %c0_i32 = arith.constant 0 : i32
    %c0_i32_0 = arith.constant 0 : i32
    %c0_i32_1 = arith.constant 0 : i32
    return %c0_i32, %c0_i32_0 : i32, i32
  }
  func.func @transform_8(%arg0: i32) -> (i32, i32) {
    %c0_i32 = arith.constant 0 : i32
    %c0_i32_0 = arith.constant 0 : i32
    %c0_i32_1 = arith.constant 0 : i32
    return %c0_i32, %c0_i32_0 : i32, i32
  }
  func.func @transform_9(%arg0: i32) -> (i32, i32) {
    %c0_i32 = arith.constant 0 : i32
    %c0_i32_0 = arith.constant 0 : i32
    return %arg0, %c0_i32 : i32, i32
  }
  func.func @transform_10(%arg0: i32) -> (i32, i32) {
    %c0_i32 = arith.constant 0 : i32
    %c0_i32_0 = arith.constant 0 : i32
    return %arg0, %c0_i32 : i32, i32
  }
}

</mosaic_0001>

<llo_original>
// kernel: tpu_custom_call.1
$region0: #{tpu_custom_call.1}
  #allocation0 [shape = 'u32[]', space=smem, size = 0x4, offset = 0x4, fixed_abs, tag = 'smem constant byte address 0x4 - core index']
  #allocation1 [shape = 'u32[144,128]{1,0:T(1,128)}', space=vmem, size = 0x12000, scoped, tag = 'internal scratch']
  %s0 = inlined_call_operand.vmem [shape: f32[16,8], index: 0, kind: input, shape index: {}]
  %s1 = inlined_call_operand.vmem [shape: f32[8,128], index: 1, kind: input, shape index: {}]
  %s2 = inlined_call_operand.vmem [shape: f32[1,128], index: 2, kind: input, shape index: {}]
  %s3 = inlined_call_operand.hbm [shape: bf16[128,256], index: 3, kind: input, shape index: {}]
  %s4 = inlined_call_operand.vmem [shape: f32[1,256], index: 4, kind: input, shape index: {}]
  %s5 = inlined_call_operand.hbm [shape: bf16[256,128], index: 5, kind: input, shape index: {}]
  %s6 = inlined_call_operand.vmem [shape: f32[1,128], index: 6, kind: input, shape index: {}]
  %s7 = inlined_call_operand.hbm [shape: bf16[128,128], index: 7, kind: input, shape index: {}]
  %s8 = inlined_call_operand.vmem [shape: f32[1,128], index: 8, kind: input, shape index: {}]
  %s9 = inlined_call_operand.hbm [shape: bf16[16,128], index: 9, kind: output, shape index: {0}]
  %s10 = inlined_call_operand.vmem [shape: s32[16,1], index: 10, kind: output, shape index: {1}]
  %11 = xla_tuple %s9, %s10
  %s12 = sld [smem:[#allocation0]]
  $region66: #{tpu_custom_call.1} parent=0
    _
  %s14 = ssub.s32 1, %s12
  %s15 = scalar_select 0, %s14, %s12
  $region1: #{tpu_custom_call.1} parent=0
    #allocation2 [shape = 'u8[65536]{0}', space=vmem, size = 0x10000, scoped, tag = 'input window, operand 3, single buffered']
    #allocation3 [shape = 's32[1]{0}', space=sflag, size = 0x4, scoped, tag = 'scoped memory for tpu_custom_call.1']
    #allocation4 [shape = 's32[1]{0}', space=sflag, size = 0x4, scoped, tag = 'scoped memory for tpu_custom_call.1']
    #allocation5 [shape = 'u8[65536]{0}', space=vmem, size = 0x10000, scoped, tag = 'input window, operand 5, single buffered']
    #allocation6 [shape = 's32[1]{0}', space=sflag, size = 0x4, scoped, tag = 'scoped memory for tpu_custom_call.1']
    #allocation7 [shape = 'u8[32768]{0}', space=vmem, size = 0x8000, scoped, tag = 'input window, operand 7, single buffered']
    #allocation8 [shape = 'u8[4096]{0}', space=vmem, size = 0x1000, scoped, tag = 'output window, operand 0, single buffered']
    %16 = vsyncpa [#allocation3], 0
    %17 = vsyncpa [#allocation6], 0
    %18 = vsyncpa [#allocation4], 0
    // Predicated region
    $region2: #{tpu_custom_call.1} parent=1 // pred_check
      _
    $region3: #{tpu_custom_call.1} parent=1 // pred_check_branch
      %20 = sbr.rel (0) target = $region5
    $region4: #{tpu_custom_call.1} parent=1 // pred_region
      _
    $region5: #{tpu_custom_call.1} parent=1 // pred_fallthru
      _
    // Predicated region
    $region6: #{tpu_custom_call.1} parent=1 // pred_check
      _
    $region7: #{tpu_custom_call.1} parent=1 // pred_check_branch
      %22 = sbr.rel (0) target = $region9
    $region8: #{tpu_custom_call.1} parent=1 // pred_region
      _
    $region9: #{tpu_custom_call.1} parent=1 // pred_fallthru
      _
    // Predicated region
    $region10: #{tpu_custom_call.1} parent=1 // pred_check
      _
    $region11: #{tpu_custom_call.1} parent=1 // pred_check_branch
      %24 = sbr.rel (0) target = $region13
    $region12: #{tpu_custom_call.1} parent=1 // pred_region
      _
    $region13: #{tpu_custom_call.1} parent=1 // pred_fallthru
      _
    // Predicated region
    $region14: #{tpu_custom_call.1} parent=1 // pred_check
      _
    $region15: #{tpu_custom_call.1} parent=1 // pred_check_branch
      %26 = sbr.rel (0) target = $region17
    $region16: #{tpu_custom_call.1} parent=1 // pred_region
      %s28 = ssub.s32 2048, 2048
      %29 = vsyncadd [#allocation3], %s28
      %s30 = sshll.u32 [#allocation2], 4
      %s31 = int_to_ptr.vmem [resolvable:$true] %s30
      %36 = dma.hbm_to_vmem [thread:$0]  %s3, 2048, %s31, [#allocation3], 128, 128, 8
    $region17: #{tpu_custom_call.1} parent=1 // pred_fallthru
      _
    // Predicated region
    $region18: #{tpu_custom_call.1} parent=1 // pred_check
      _
    $region19: #{tpu_custom_call.1} parent=1 // pred_check_branch
      %38 = sbr.rel (0) target = $region21
    $region20: #{tpu_custom_call.1} parent=1 // pred_region
      _
    $region21: #{tpu_custom_call.1} parent=1 // pred_fallthru
      _
    // Predicated region
    $region22: #{tpu_custom_call.1} parent=1 // pred_check
      _
    $region23: #{tpu_custom_call.1} parent=1 // pred_check_branch
      %40 = sbr.rel (0) target = $region25
    $region24: #{tpu_custom_call.1} parent=1 // pred_region
      %s42 = ssub.s32 2048, 2048
      %43 = vsyncadd [#allocation6], %s42
      %s44 = sshll.u32 [#allocation5], 4
      %s45 = int_to_ptr.vmem [resolvable:$true] %s44
      %50 = dma.hbm_to_vmem [thread:$0]  %s5, 2048, %s45, [#allocation6], 64, 64, 4
    $region25: #{tpu_custom_call.1} parent=1 // pred_fallthru
      _
    // Predicated region
    $region26: #{tpu_custom_call.1} parent=1 // pred_check
      _
    $region27: #{tpu_custom_call.1} parent=1 // pred_check_branch
      %52 = sbr.rel (0) target = $region29
    $region28: #{tpu_custom_call.1} parent=1 // pred_region
      _
    $region29: #{tpu_custom_call.1} parent=1 // pred_fallthru
      _
    // Predicated region
    $region30: #{tpu_custom_call.1} parent=1 // pred_check
      _
    $region31: #{tpu_custom_call.1} parent=1 // pred_check_branch
      %54 = sbr.rel (0) target = $region33
    $region32: #{tpu_custom_call.1} parent=1 // pred_region
      %s56 = ssub.s32 1024, 1024
      %57 = vsyncadd [#allocation6], %s56
      %s58 = sshll.u32 [#allocation7], 4
      %s59 = int_to_ptr.vmem [resolvable:$true] %s58
      %64 = dma.hbm_to_vmem [thread:$0]  %s7, 1024, %s59, [#allocation6], 64, 64, 4
    $region33: #{tpu_custom_call.1} parent=1 // pred_fallthru
      _
    // Predicated region
    $region34: #{tpu_custom_call.1} parent=1 // pred_check
      _
    $region35: #{tpu_custom_call.1} parent=1 // pred_check_branch
      %66 = sbr.rel (0) target = $region37
    $region36: #{tpu_custom_call.1} parent=1 // pred_region
      _
    $region37: #{tpu_custom_call.1} parent=1 // pred_fallthru
      _
    // Predicated region
    $region38: #{tpu_custom_call.1} parent=1 // pred_check
      _
    $region39: #{tpu_custom_call.1} parent=1 // pred_check_branch
      %68 = sbr.rel (0) target = $region41
    $region40: #{tpu_custom_call.1} parent=1 // pred_region
      %69 = dma.done [#allocation3], 2048
    $region41: #{tpu_custom_call.1} parent=1 // pred_fallthru
      _
    // Predicated region
    $region42: #{tpu_custom_call.1} parent=1 // pred_check
      _
    $region43: #{tpu_custom_call.1} parent=1 // pred_check_branch
      %71 = sbr.rel (0) target = $region45
    $region44: #{tpu_custom_call.1} parent=1 // pred_region
      %72 = dma.done [#allocation6], 2048
    $region45: #{tpu_custom_call.1} parent=1 // pred_fallthru
      _
    // Predicated region
    $region46: #{tpu_custom_call.1} parent=1 // pred_check
      _
    $region47: #{tpu_custom_call.1} parent=1 // pred_check_branch
      %74 = sbr.rel (0) target = $region49
    $region48: #{tpu_custom_call.1} parent=1 // pred_region
      %75 = dma.done [#allocation6], 1024
    $region49: #{tpu_custom_call.1} parent=1 // pred_fallthru
      _
    %v77 = vld [vmem:[%s0] sm:$0xff]
    %v78 = vld [vmem:[%s0 + $0x8] sm:$0xff]
    %v79 = vld [vmem:[%s1] sm:$0xff]
    %v80 = vld [vmem:[%s2] sm:$0x1]
    %v82 = vlaneseq
    %v83 = vshrl.u32 %v82, 7
    %v84 = vsub.s32 0, %v83
    %v85 = vrot.slane %v80, %v84
    %vm87 = vcmask 64512
    %v89 = vsel %vm87, %v77, 0
    %v92 = vsel %vm87, %v78, 0
    %94 = vmatprep.subr.mxu0 0.0
    %95 = vmatpush1.msra.mxu0 0.0
    %96 = vmatprep.subr.mxu0 0.0
    %97 = vmatpush1.msra.mxu0 0.0
    %98 = vmatprep.subr.mxu0 0.0
    %99 = vmatpush1.msra.mxu0 0.0
    %100 = vmatprep.subr.mxu0 0.0
    %101 = vmatpush1.msra.mxu0 0.0
    %102 = vmatprep.subr.mxu0 0.0
    %103 = vmatpush1.msra.mxu0 0.0
    %104 = vmatprep.subr.mxu0 0.0
    %105 = vmatpush1.msra.mxu0 0.0
    %106 = vmatprep.subr.mxu0 0.0
    %107 = vmatpush1.msra.mxu0 0.0
    %108 = vmatprep.subr.mxu0 0.0
    %109 = vmatpush1.msra.mxu0 0.0
    %110 = vmatprep.subr.mxu0 0.0
    %111 = vmatpush1.msra.mxu0 0.0
    %112 = vmatprep.subr.mxu0 0.0
    %113 = vmatpush1.msra.mxu0 0.0
    %114 = vmatprep.subr.mxu0 0.0
    %115 = vmatpush1.msra.mxu0 0.0
    %116 = vmatprep.subr.mxu0 0.0
    %117 = vmatpush1.msra.mxu0 0.0
    %118 = vmatprep.subr.mxu0 0.0
    %119 = vmatpush1.msra.mxu0 0.0
    %120 = vmatprep.subr.mxu0 0.0
    %121 = vmatpush1.msra.mxu0 0.0
    %122 = vmatprep.subr.mxu0 0.0
    %123 = vmatpush1.msra.mxu0 0.0
    %124 = vmatprep.subr.mxu0 0.0
    %125 = vmatpush1.msra.mxu0 %v79
    %126 = vmatprep.subr.mxu0 0.0
    %127 = vmatpush2.msra.mxu0 0.0
    %128 = vmatprep.subr.mxu0 0.0
    %129 = vmatpush2.msra.mxu0 0.0
    %130 = vmatprep.subr.mxu0 0.0
    %131 = vmatpush2.msra.mxu0 0.0
    %132 = vmatprep.subr.mxu0 0.0
    %133 = vmatpush2.msra.mxu0 0.0
    %134 = vmatprep.subr.mxu0 0.0
    %135 = vmatpush2.msra.mxu0 0.0
    %136 = vmatprep.subr.mxu0 0.0
    %137 = vmatpush2.msra.mxu0 0.0
    %138 = vmatprep.subr.mxu0 0.0
    %139 = vmatpush2.msra.mxu0 0.0
    %140 = vmatprep.subr.mxu0 0.0
    %141 = vmatpush2.msra.mxu0 0.0
    %142 = vmatprep.subr.mxu0 0.0
    %143 = vmatpush2.msra.mxu0 0.0
    %144 = vmatprep.subr.mxu0 0.0
    %145 = vmatpush2.msra.mxu0 0.0
    %146 = vmatprep.subr.mxu0 0.0
    %147 = vmatpush2.msra.mxu0 0.0
    %148 = vmatprep.subr.mxu0 0.0
    %149 = vmatpush2.msra.mxu0 0.0
    %150 = vmatprep.subr.mxu0 0.0
    %151 = vmatpush2.msra.mxu0 0.0
    %152 = vmatprep.subr.mxu0 0.0
    %153 = vmatpush2.msra.mxu0 0.0
    %154 = vmatprep.subr.mxu0 0.0
    %155 = vmatpush2.msra.mxu0 0.0
    %156 = vmatprep.subr.mxu0 0.0
    %157 = vmatpush2.msra.mxu0 0.0
    %158 = vmatprep.mubr.f32.mxu0 0.0
    %159 = vmatmul.mubr.f32.gmra.mxu0 %v89
    %v160 = vpop.f32.mrf.mxu0
    %v161 = vadd.f32 %v85, %v160
    %v162 = vpop.f32.mrf.mxu0
    %163 = vmatprep.mubr.f32.mxu0 0.0
    %164 = vmatmul.mubr.f32.gmra.mxu0 %v92
    %v165 = vpop.f32.mrf.mxu0
    %v166 = vadd.f32 %v85, %v165
    %v167 = vpop.f32.mrf.mxu0
    %168 = vdwg.mxu0
    %v169 = vmax.f32 %v161, 0.0
    %v170 = vmax.f32 %v166, 0.0
    %v171 = vpack.c.bf16 %v170, %v169
    %v172 = vld [vmem:[#allocation2] sm:$0xff]
    %v173 = vld [vmem:[#allocation2 + $0x8] sm:$0xff]
    %v174 = vld [vmem:[#allocation2 + $0x10] sm:$0xff]
    %v175 = vld [vmem:[#allocation2 + $0x18] sm:$0xff]
    %v176 = vld [vmem:[#allocation2 + $0x20] sm:$0xff]
    %v177 = vld [vmem:[#allocation2 + $0x28] sm:$0xff]
    %v178 = vld [vmem:[#allocation2 + $0x30] sm:$0xff]
    %v179 = vld [vmem:[#allocation2 + $0x38] sm:$0xff]
    %v180 = vld [vmem:[#allocation2 + $0x40] sm:$0xff]
    %v181 = vld [vmem:[#allocation2 + $0x48] sm:$0xff]
    %v182 = vld [vmem:[#allocation2 + $0x50] sm:$0xff]
    %v183 = vld [vmem:[#allocation2 + $0x58] sm:$0xff]
    %v184 = vld [vmem:[#allocation2 + $0x60] sm:$0xff]
    %v185 = vld [vmem:[#allocation2 + $0x68] sm:$0xff]
    %v186 = vld [vmem:[#allocation2 + $0x70] sm:$0xff]
    %v187 = vld [vmem:[#allocation2 + $0x78] sm:$0xff]
    %v188 = vld [vmem:[%s4] sm:$0x3]
    %v190 = vlaneseq
    %v191 = vshrl.u32 %v190, 7
    %v192 = vsub.s32 0, %v191
    %v193 = vrot.slane %v188, %v192
    %v194 = vlaneseq
    %v195 = vshrl.u32 %v194, 7
    %v196 = vsub.s32 1, %v195
    %v197 = vrot.slane %v188, %v196
    %v216 = vunpack.c.l.b16 %v172
    %v217 = vunpack.c.h.b16 %v172
    %v218 = vunpack.c.l.b16 %v173
    %v219 = vunpack.c.h.b16 %v173
    %v220 = vunpack.c.l.b16 %v174
    %v221 = vunpack.c.h.b16 %v174
    %v222 = vunpack.c.l.b16 %v175
    %v223 = vunpack.c.h.b16 %v175
    %v224 = vunpack.c.l.b16 %v176
    %v225 = vunpack.c.h.b16 %v176
    %v226 = vunpack.c.l.b16 %v177
    %v227 = vunpack.c.h.b16 %v177
    %v228 = vunpack.c.l.b16 %v178
    %v229 = vunpack.c.h.b16 %v178
    %v230 = vunpack.c.l.b16 %v179
    %v231 = vunpack.c.h.b16 %v179
    %v232 = vunpack.c.l.b16 %v180
    %v233 = vunpack.c.h.b16 %v180
    %v234 = vunpack.c.l.b16 %v181
    %v235 = vunpack.c.h.b16 %v181
    %v236 = vunpack.c.l.b16 %v182
    %v237 = vunpack.c.h.b16 %v182
    %v238 = vunpack.c.l.b16 %v183
    %v239 = vunpack.c.h.b16 %v183
    %v240 = vunpack.c.l.b16 %v184
    %v241 = vunpack.c.h.b16 %v184
    %v242 = vunpack.c.l.b16 %v185
    %v243 = vunpack.c.h.b16 %v185
    %v244 = vunpack.c.l.b16 %v186
    %v245 = vunpack.c.h.b16 %v186
    %v246 = vunpack.c.l.b16 %v187
    %v247 = vunpack.c.h.b16 %v187
    %v248 = vpack.c.b16 %v218, %v216
    %v249 = vpack.c.b16 %v219, %v217
    %v250 = vpack.c.b16 %v222, %v220
    %v251 = vpack.c.b16 %v223, %v221
    %v252 = vpack.c.b16 %v226, %v224
    %v253 = vpack.c.b16 %v227, %v225
    %v254 = vpack.c.b16 %v230, %v228
    %v255 = vpack.c.b16 %v231, %v229
    %v256 = vpack.c.b16 %v234, %v232
    %v257 = vpack.c.b16 %v235, %v233
    %v258 = vpack.c.b16 %v238, %v236
    %v259 = vpack.c.b16 %v239, %v237
    %v260 = vpack.c.b16 %v242, %v240
    %v261 = vpack.c.b16 %v243, %v241
    %v262 = vpack.c.b16 %v246, %v244
    %v263 = vpack.c.b16 %v247, %v245
    %280 = vmatprep.subr.bf16.mxu0 %v263
    %281 = vmatpush1.bf16.msra.mxu0 %v262
    %282 = vmatprep.subr.bf16.mxu0 %v261
    %283 = vmatpush1.bf16.msra.mxu0 %v260
    %284 = vmatprep.subr.bf16.mxu0 %v259
    %285 = vmatpush1.bf16.msra.mxu0 %v258
    %286 = vmatprep.subr.bf16.mxu0 %v257
    %287 = vmatpush1.bf16.msra.mxu0 %v256
    %288 = vmatprep.subr.bf16.mxu0 %v255
    %289 = vmatpush1.bf16.msra.mxu0 %v254
    %290 = vmatprep.subr.bf16.mxu0 %v253
    %291 = vmatpush1.bf16.msra.mxu0 %v252
    %292 = vmatprep.subr.bf16.mxu0 %v251
    %293 = vmatpush1.bf16.msra.mxu0 %v250
    %294 = vmatprep.subr.bf16.mxu0 %v249
    %295 = vmatpush1.bf16.msra.mxu0 %v248
    %296 = vmatprep.subr.bf16.mxu0 0
    %297 = vmatpush2.bf16.msra.mxu0 0
    %298 = vmatprep.subr.bf16.mxu0 0
    %299 = vmatpush2.bf16.msra.mxu0 0
    %300 = vmatprep.subr.bf16.mxu0 0
    %301 = vmatpush2.bf16.msra.mxu0 0
    %302 = vmatprep.subr.bf16.mxu0 0
    %303 = vmatpush2.bf16.msra.mxu0 0
    %304 = vmatprep.subr.bf16.mxu0 0
    %305 = vmatpush2.bf16.msra.mxu0 0
    %306 = vmatprep.subr.bf16.mxu0 0
    %307 = vmatpush2.bf16.msra.mxu0 0
    %308 = vmatprep.subr.bf16.mxu0 0
    %309 = vmatpush2.bf16.msra.mxu0 0
    %310 = vmatprep.subr.bf16.mxu0 0
    %311 = vmatpush2.bf16.msra.mxu0 0
    %312 = vmatprep.mubr.bf16.mxu0 0
    %313 = vmatmul.mubr.bf16.gmra.mxu0 %v171
    %v314 = vpop.f32.mrf.mxu0
    %v315 = vadd.f32 %v193, %v314
    %v316 = vpop.f32.mrf.mxu0
    %v317 = vadd.f32 %v197, %v316
    %v318 = vpop.f32.mrf.mxu0
    %v319 = vadd.f32 %v193, %v318
    %v320 = vpop.f32.mrf.mxu0
    %v321 = vadd.f32 %v197, %v320
    %322 = vdwg.mxu0
    %v323 = vmax.f32 %v315, 0.0
    %v324 = vmax.f32 %v317, 0.0
    %v325 = vmax.f32 %v319, 0.0
    %v326 = vmax.f32 %v321, 0.0
    %v327 = vpack.c.bf16 %v325, %v323
    %v328 = vpack.c.bf16 %v326, %v324
    %v329 = vld [vmem:[#allocation5] sm:$0xf]
    %v330 = vld [vmem:[#allocation5 + $0x4] sm:$0xf]
    %v331 = vld [vmem:[#allocation5 + $0x8] sm:$0xf]
    %v332 = vld [vmem:[#allocation5 + $0xc] sm:$0xf]
    %v333 = vld [vmem:[#allocation5 + $0x10] sm:$0xf]
    %v334 = vld [vmem:[#allocation5 + $0x14] sm:$0xf]
    %v335 = vld [vmem:[#allocation5 + $0x18] sm:$0xf]
    %v336 = vld [vmem:[#allocation5 + $0x1c] sm:$0xf]
    %v337 = vld [vmem:[#allocation5 + $0x20] sm:$0xf]
    %v338 = vld [vmem:[#allocation5 + $0x24] sm:$0xf]
    %v339 = vld [vmem:[#allocation5 + $0x28] sm:$0xf]
    %v340 = vld [vmem:[#allocation5 + $0x2c] sm:$0xf]
    %v341 = vld [vmem:[#allocation5 + $0x30] sm:$0xf]
    %v342 = vld [vmem:[#allocation5 + $0x34] sm:$0xf]
    %v343 = vld [vmem:[#allocation5 + $0x38] sm:$0xf]
    %v344 = vld [vmem:[#allocation5 + $0x3c] sm:$0xf]
    %v345 = vld [vmem:[#allocation5 + $0x40] sm:$0xf]
    %v346 = vld [vmem:[#allocation5 + $0x44] sm:$0xf]
    %v347 = vld [vmem:[#allocation5 + $0x48] sm:$0xf]
    %v348 = vld [vmem:[#allocation5 + $0x4c] sm:$0xf]
    %v349 = vld [vmem:[#allocation5 + $0x50] sm:$0xf]
    %v350 = vld [vmem:[#allocation5 + $0x54] sm:$0xf]
    %v351 = vld [vmem:[#allocation5 + $0x58] sm:$0xf]
    %v352 = vld [vmem:[#allocation5 + $0x5c] sm:$0xf]
    %v353 = vld [vmem:[#allocation5 + $0x60] sm:$0xf]
    %v354 = vld [vmem:[#allocation5 + $0x64] sm:$0xf]
    %v355 = vld [vmem:[#allocation5 + $0x68] sm:$0xf]
    %v356 = vld [vmem:[#allocation5 + $0x6c] sm:$0xf]
    %v357 = vld [vmem:[#allocation5 + $0x70] sm:$0xf]
    %v358 = vld [vmem:[#allocation5 + $0x74] sm:$0xf]
    %v359 = vld [vmem:[#allocation5 + $0x78] sm:$0xf]
    %v360 = vld [vmem:[#allocation5 + $0x7c] sm:$0xf]
    %v361 = vld [vmem:[%s6] sm:$0x1]
    %v363 = vlaneseq
    %v364 = vshrl.u32 %v363, 7
    %v365 = vsub.s32 0, %v364
    %v366 = vrot.slane %v361, %v365
    %v400 = vunpack.c.l.b16 %v329
    %v401 = vunpack.c.l.b16 %v330
    %v402 = vunpack.c.l.b16 %v331
    %v403 = vunpack.c.l.b16 %v332
    %v404 = vunpack.c.l.b16 %v333
    %v405 = vunpack.c.l.b16 %v334
    %v406 = vunpack.c.l.b16 %v335
    %v407 = vunpack.c.l.b16 %v336
    %v408 = vunpack.c.l.b16 %v337
    %v409 = vunpack.c.l.b16 %v338
    %v410 = vunpack.c.l.b16 %v339
    %v411 = vunpack.c.l.b16 %v340
    %v412 = vunpack.c.l.b16 %v341
    %v413 = vunpack.c.l.b16 %v342
    %v414 = vunpack.c.l.b16 %v343
    %v415 = vunpack.c.l.b16 %v344
    %v416 = vunpack.c.l.b16 %v345
    %v417 = vunpack.c.l.b16 %v346
    %v418 = vunpack.c.l.b16 %v347
    %v419 = vunpack.c.l.b16 %v348
    %v420 = vunpack.c.l.b16 %v349
    %v421 = vunpack.c.l.b16 %v350
    %v422 = vunpack.c.l.b16 %v351
    %v423 = vunpack.c.l.b16 %v352
    %v424 = vunpack.c.l.b16 %v353
    %v425 = vunpack.c.l.b16 %v354
    %v426 = vunpack.c.l.b16 %v355
    %v427 = vunpack.c.l.b16 %v356
    %v428 = vunpack.c.l.b16 %v357
    %v429 = vunpack.c.l.b16 %v358
    %v430 = vunpack.c.l.b16 %v359
    %v431 = vunpack.c.l.b16 %v360
    %v432 = vpack.c.b16 %v401, %v400
    %v433 = vpack.c.b16 %v403, %v402
    %v434 = vpack.c.b16 %v405, %v404
    %v435 = vpack.c.b16 %v407, %v406
    %v436 = vpack.c.b16 %v409, %v408
    %v437 = vpack.c.b16 %v411, %v410
    %v438 = vpack.c.b16 %v413, %v412
    %v439 = vpack.c.b16 %v415, %v414
    %v440 = vpack.c.b16 %v417, %v416
    %v441 = vpack.c.b16 %v419, %v418
    %v442 = vpack.c.b16 %v421, %v420
    %v443 = vpack.c.b16 %v423, %v422
    %v444 = vpack.c.b16 %v425, %v424
    %v445 = vpack.c.b16 %v427, %v426
    %v446 = vpack.c.b16 %v429, %v428
    %v447 = vpack.c.b16 %v431, %v430
    %464 = vmatprep.subr.bf16.mxu0 0
    %465 = vmatpush1.bf16.msra.mxu0 %v439
    %466 = vmatprep.subr.bf16.mxu0 0
    %467 = vmatpush1.bf16.msra.mxu0 %v438
    %468 = vmatprep.subr.bf16.mxu0 0
    %469 = vmatpush1.bf16.msra.mxu0 %v437
    %470 = vmatprep.subr.bf16.mxu0 0
    %471 = vmatpush1.bf16.msra.mxu0 %v436
    %472 = vmatprep.subr.bf16.mxu0 0
    %473 = vmatpush1.bf16.msra.mxu0 %v435
    %474 = vmatprep.subr.bf16.mxu0 0
    %475 = vmatpush1.bf16.msra.mxu0 %v434
    %476 = vmatprep.subr.bf16.mxu0 0
    %477 = vmatpush1.bf16.msra.mxu0 %v433
    %478 = vmatprep.subr.bf16.mxu0 0
    %479 = vmatpush1.bf16.msra.mxu0 %v432
    %480 = vmatprep.subr.bf16.mxu0 0
    %481 = vmatpush2.bf16.msra.mxu0 %v447
    %482 = vmatprep.subr.bf16.mxu0 0
    %483 = vmatpush2.bf16.msra.mxu0 %v446
    %484 = vmatprep.subr.bf16.mxu0 0
    %485 = vmatpush2.bf16.msra.mxu0 %v445
    %486 = vmatprep.subr.bf16.mxu0 0
    %487 = vmatpush2.bf16.msra.mxu0 %v444
    %488 = vmatprep.subr.bf16.mxu0 0
    %489 = vmatpush2.bf16.msra.mxu0 %v443
    %490 = vmatprep.subr.bf16.mxu0 0
    %491 = vmatpush2.bf16.msra.mxu0 %v442
    %492 = vmatprep.subr.bf16.mxu0 0
    %493 = vmatpush2.bf16.msra.mxu0 %v441
    %494 = vmatprep.subr.bf16.mxu0 0
    %495 = vmatpush2.bf16.msra.mxu0 %v440
    %496 = vmatprep.mubr.bf16.mxu0 %v328
    %497 = vmatmul.mubr.bf16.gmra.mxu0 %v327
    %v498 = vpop.f32.mrf.mxu0
    %v499 = vadd.f32 %v366, %v498
    %v500 = vpop.f32.mrf.mxu0
    %v501 = vpop.f32.mrf.mxu0
    %v502 = vadd.f32 %v366, %v501
    %v503 = vpop.f32.mrf.mxu0
    %504 = vdwg.mxu0
    %v505 = vmax.f32 %v499, 0.0
    %v506 = vmax.f32 %v502, 0.0
    %v507 = vpack.c.bf16 %v506, %v505
    %v508 = vld [vmem:[#allocation7] sm:$0xf]
    %v509 = vld [vmem:[#allocation7 + $0x4] sm:$0xf]
    %v510 = vld [vmem:[#allocation7 + $0x8] sm:$0xf]
    %v511 = vld [vmem:[#allocation7 + $0xc] sm:$0xf]
    %v512 = vld [vmem:[#allocation7 + $0x10] sm:$0xf]
    %v513 = vld [vmem:[#allocation7 + $0x14] sm:$0xf]
    %v514 = vld [vmem:[#allocation7 + $0x18] sm:$0xf]
    %v515 = vld [vmem:[#allocation7 + $0x1c] sm:$0xf]
    %v516 = vld [vmem:[#allocation7 + $0x20] sm:$0xf]
    %v517 = vld [vmem:[#allocation7 + $0x24] sm:$0xf]
    %v518 = vld [vmem:[#allocation7 + $0x28] sm:$0xf]
    %v519 = vld [vmem:[#allocation7 + $0x2c] sm:$0xf]
    %v520 = vld [vmem:[#allocation7 + $0x30] sm:$0xf]
    %v521 = vld [vmem:[#allocation7 + $0x34] sm:$0xf]
    %v522 = vld [vmem:[#allocation7 + $0x38] sm:$0xf]
    %v523 = vld [vmem:[#allocation7 + $0x3c] sm:$0xf]
    %v524 = vld [vmem:[%s8] sm:$0x1]
    %v526 = vlaneseq
    %v527 = vshrl.u32 %v526, 7
    %v528 = vsub.s32 0, %v527
    %v529 = vrot.slane %v524, %v528
    %v547 = vunpack.c.l.b16 %v508
    %v548 = vunpack.c.l.b16 %v509
    %v549 = vunpack.c.l.b16 %v510
    %v550 = vunpack.c.l.b16 %v511
    %v551 = vunpack.c.l.b16 %v512
    %v552 = vunpack.c.l.b16 %v513
    %v553 = vunpack.c.l.b16 %v514
    %v554 = vunpack.c.l.b16 %v515
    %v555 = vunpack.c.l.b16 %v516
    %v556 = vunpack.c.l.b16 %v517
    %v557 = vunpack.c.l.b16 %v518
    %v558 = vunpack.c.l.b16 %v519
    %v559 = vunpack.c.l.b16 %v520
    %v560 = vunpack.c.l.b16 %v521
    %v561 = vunpack.c.l.b16 %v522
    %v562 = vunpack.c.l.b16 %v523
    %v563 = vpack.c.b16 %v548, %v547
    %v564 = vpack.c.b16 %v550, %v549
    %v565 = vpack.c.b16 %v552, %v551
    %v566 = vpack.c.b16 %v554, %v553
    %v567 = vpack.c.b16 %v556, %v555
    %v568 = vpack.c.b16 %v558, %v557
    %v569 = vpack.c.b16 %v560, %v559
    %v570 = vpack.c.b16 %v562, %v561
    %579 = vmatprep.subr.bf16.mxu0 0
    %580 = vmatpush1.bf16.msra.mxu0 %v570
    %581 = vmatprep.subr.bf16.mxu0 0
    %582 = vmatpush1.bf16.msra.mxu0 %v569
    %583 = vmatprep.subr.bf16.mxu0 0
    %584 = vmatpush1.bf16.msra.mxu0 %v568
    %585 = vmatprep.subr.bf16.mxu0 0
    %586 = vmatpush1.bf16.msra.mxu0 %v567
    %587 = vmatprep.subr.bf16.mxu0 0
    %588 = vmatpush1.bf16.msra.mxu0 %v566
    %589 = vmatprep.subr.bf16.mxu0 0
    %590 = vmatpush1.bf16.msra.mxu0 %v565
    %591 = vmatprep.subr.bf16.mxu0 0
    %592 = vmatpush1.bf16.msra.mxu0 %v564
    %593 = vmatprep.subr.bf16.mxu0 0
    %594 = vmatpush1.bf16.msra.mxu0 %v563
    %595 = vmatprep.subr.bf16.mxu0 0
    %596 = vmatpush2.bf16.msra.mxu0 0
    %597 = vmatprep.subr.bf16.mxu0 0
    %598 = vmatpush2.bf16.msra.mxu0 0
    %599 = vmatprep.subr.bf16.mxu0 0
    %600 = vmatpush2.bf16.msra.mxu0 0
    %601 = vmatprep.subr.bf16.mxu0 0
    %602 = vmatpush2.bf16.msra.mxu0 0
    %603 = vmatprep.subr.bf16.mxu0 0
    %604 = vmatpush2.bf16.msra.mxu0 0
    %605 = vmatprep.subr.bf16.mxu0 0
    %606 = vmatpush2.bf16.msra.mxu0 0
    %607 = vmatprep.subr.bf16.mxu0 0
    %608 = vmatpush2.bf16.msra.mxu0 0
    %609 = vmatprep.subr.bf16.mxu0 0
    %610 = vmatpush2.bf16.msra.mxu0 0
    %611 = vmatprep.mubr.bf16.mxu0 0
    %612 = vmatmul.mubr.bf16.gmra.mxu0 %v507
    %v613 = vpop.f32.mrf.mxu0
    %v614 = vadd.f32 %v529, %v613
    %v615 = vpop.f32.mrf.mxu0
    %v616 = vpop.f32.mrf.mxu0
    %v617 = vadd.f32 %v529, %v616
    %v618 = vpop.f32.mrf.mxu0
    %619 = vdwg.mxu0
    %v620 = vpack.c.bf16 %v617, %v614
    %v622 = vunpack.c.l.b16 %v620
    %v623 = vunpack.c.h.b16 %v620
    %v624 = vpack.c.b16 %v622, %v622
    %v625 = vpack.c.b16 %v623, %v623
    %628 = vst [vmem:[#allocation8] sm:$0xf] %v624
    %629 = vst [vmem:[#allocation8 + $0x4] sm:$0xf] %v625
    %v630 = vunpack.c.l.bf16 %v620
    %v631 = vunpack.c.h.bf16 %v620
    %v632 = vlaneseq
    %v633 = vand.u32 %v632, 127
    %vm634 = vcmp.lt.s32.totalorder %v633, 4
    %v635 = vsel %vm634, %v630, -inf
    %v636 = vsel %vm634, %v631, -inf
    %637 = vmax.xlane.f32.xlu0 %v635
    %v638 = vpop.xlane.xlu0 %637
    %639 = vmax.xlane.f32.xlu0 %v636
    %v640 = vpop.xlane.xlu0 %639
    %vm641 = vcmp.eq.f32.partialorder %v635, %v638
    %vm642 = vcmp.eq.f32.partialorder %v636, %v640
    %v643 = vsel %vm641, %v633, 128
    %v644 = vsel %vm642, %v633, 128
    %v645 = vand.u32 %v643, 65535
    %v646 = vshra.s32 %v643, 16
    %v647 = vcvt.s32.f32 %v645
    %v648 = vcvt.s32.f32 %v646
    %649 = vmin.xlane.f32.xlu0 %v648
    %v650 = vpop.xlane.xlu0 %649
    %vm651 = vcmp.eq.f32.partialorder %v648, %v650
    %v652 = vsel %vm651, %v647, inf
    %653 = vmin.xlane.f32.xlu0 %v652
    %v654 = vpop.xlane.xlu0 %653
    %v655 = vcvt.f32.s32 %v654
    %v656 = vcvt.f32.s32 %v650
    %v657 = vshll.u32 %v656, 16
    %v658 = vadd.s32 %v657, %v655
    %v659 = vand.u32 %v644, 65535
    %v660 = vshra.s32 %v644, 16
    %v661 = vcvt.s32.f32 %v659
    %v662 = vcvt.s32.f32 %v660
    %663 = vmin.xlane.f32.xlu0 %v662
    %v664 = vpop.xlane.xlu0 %663
    %vm665 = vcmp.eq.f32.partialorder %v662, %v664
    %v666 = vsel %vm665, %v661, inf
    %667 = vmin.xlane.f32.xlu0 %v666
    %v668 = vpop.xlane.xlu0 %667
    %v669 = vcvt.f32.s32 %v668
    %v670 = vcvt.f32.s32 %v664
    %v671 = vshll.u32 %v670, 16
    %v672 = vadd.s32 %v671, %v669
    %vm673 = vcmask 7168
    %674 = vst.msk [vmem:[%s10] sm:$0xff] %vm673, %v658
    %675 = vst.msk [vmem:[%s10 + $0x8] sm:$0xff] %vm673, %v672
    // Predicated region
    $region50: #{tpu_custom_call.1} parent=1 // pred_check
      _
    $region51: #{tpu_custom_call.1} parent=1 // pred_check_branch
      %677 = sbr.rel (0) target = $region53
    $region52: #{tpu_custom_call.1} parent=1 // pred_region
      %s679 = ssub.s32 128, 128
      %680 = vsyncadd [#allocation4], %s679
      %s681 = sshll.u32 [#allocation8], 4
      %s682 = int_to_ptr.vmem [resolvable:$true] %s681
      %687 = dma.vmem_to_hbm [thread:$0]  %s682, 128, %s9, [#allocation4], 64, 64, 4
    $region53: #{tpu_custom_call.1} parent=1 // pred_fallthru
      _
    // Predicated region
    $region54: #{tpu_custom_call.1} parent=1 // pred_check
      _
    $region55: #{tpu_custom_call.1} parent=1 // pred_check_branch
      %689 = sbr.rel (0) target = $region57
    $region56: #{tpu_custom_call.1} parent=1 // pred_region
      _
    $region57: #{tpu_custom_call.1} parent=1 // pred_fallthru
      _
    // Predicated region
    $region58: #{tpu_custom_call.1} parent=1 // pred_check
      _
    $region59: #{tpu_custom_call.1} parent=1 // pred_check_branch
      %691 = sbr.rel (0) target = $region61
    $region60: #{tpu_custom_call.1} parent=1 // pred_region
      %692 = dma.done [#allocation4], 128
    $region61: #{tpu_custom_call.1} parent=1 // pred_fallthru
      _
    // Predicated region
    $region62: #{tpu_custom_call.1} parent=1 // pred_check
      _
    $region63: #{tpu_custom_call.1} parent=1 // pred_check_branch
      %694 = sbr.rel (0) target = $region65
    $region64: #{tpu_custom_call.1} parent=1 // pred_region
      _
    $region65: #{tpu_custom_call.1} parent=1 // pred_fallthru
      _
    %695 = vsyncpa [#allocation3], 1
    %696 = vsyncpa [#allocation6], 1
    %697 = vsyncpa [#allocation4], 1

</llo_original>
